<compile_context>
chip_gen: v6e
topology: v6e:2x2x1
jax: 0.10.0
libtpu: 0.0.40
codegen_flags: <defaults>
</compile_context>

<pallas_src>
import functools

import jax
import jax.numpy as jnp
from jax.experimental import pallas as pl
from jax.experimental.pallas import tpu as pltpu


def _dice_loss_kernel(x_ref, t_ref, out_ref, *, n_batch, hw, smooth):
    n = pl.program_id(0)

    x = x_ref[...].astype(jnp.float32)        # (C, HW) logits for sample n
    t = t_ref[...]                            # (1, HW) int32 class labels

    # Numerically stable softmax over the channel (sublane) axis.
    m = jnp.max(x, axis=0, keepdims=True)     # (1, HW)
    e = jnp.exp(x - m)                        # (C, HW)
    p = e / jnp.sum(e, axis=0, keepdims=True)  # (C, HW)

    # One-hot mask built in-register: mask[c, hw] = (target[hw] == c).
    num_classes = x.shape[0]
    classes = jax.lax.broadcasted_iota(jnp.int32, (num_classes, hw), 0)
    mask = (classes == t).astype(jnp.float32)  # (C, HW), broadcast over channel

    inter = jnp.sum(p * mask)                 # sum_{c,hw} softmax * one_hot
    p_sum = jnp.sum(p)                        # matches input_flat.sum(1)
    t_sum = jnp.float32(hw)                   # one-hot sums to exactly H*W

    dice = 2.0 * (inter + smooth) / (p_sum + t_sum + smooth)

    @pl.when(n == 0)
    def _():
        out_ref[0] = jnp.float32(0.0)

    out_ref[0] += dice

    @pl.when(n == n_batch - 1)
    def _():
        out_ref[0] = jnp.float32(1.0) - out_ref[0] / jnp.float32(n_batch)


def dice_loss(logits, target, *, smooth=1e-5):
    """logits: (N, C, H, W) float, target: (N, H, W) int -> scalar f32 loss."""
    N, C, H, W = logits.shape
    HW = H * W
    x = logits.reshape(N, C, HW)                       # spatial axis on lanes
    t = target.reshape(N, 1, HW).astype(jnp.int32)

    kernel = functools.partial(_dice_loss_kernel, n_batch=N, hw=HW, smooth=smooth)
    out = pl.pallas_call(
        kernel,
        out_shape=jax.ShapeDtypeStruct((1,), jnp.float32),
        grid=(N,),
        in_specs=[
            # Leading batch dim squeezed; last-two block dims are the full
            # array extents, so the (8, 128) tiling rule is satisfied.
            pl.BlockSpec((None, C, HW), lambda n: (n, 0, 0)),
            pl.BlockSpec((None, 1, HW), lambda n: (n, 0, 0)),
        ],
        # Scalar accumulator lives in SMEM and stays resident across the grid.
        out_specs=pl.BlockSpec(memory_space=pltpu.MemorySpace.SMEM),
        compiler_params=pltpu.CompilerParams(
            # Batch axis is a reduction into one scalar -> "arbitrary".
            dimension_semantics=("arbitrary",),
        ),
    )(x, t)
    return out[0]


def dice_loss_ref(logits, target, smooth=1e-5):
    """Plain-JAX reference mirroring the PyTorch forward exactly."""
    N, C = logits.shape[0], logits.shape[1]
    p = jax.nn.softmax(logits.astype(jnp.float32), axis=1)       # (N, C, H, W)
    onehot = jax.nn.one_hot(target, C, dtype=jnp.float32)        # (N, H, W, C)
    onehot = jnp.transpose(onehot, (0, 3, 1, 2))                 # (N, C, H, W)
    input_flat = p.reshape(N, -1)
    target_flat = onehot.reshape(N, -1)
    inter = jnp.sum(input_flat * target_flat, axis=1)
    dice = 2.0 * (inter + smooth) / (
        jnp.sum(input_flat, axis=1) + jnp.sum(target_flat, axis=1) + smooth)
    return 1.0 - jnp.mean(dice)


if __name__ == "__main__":
    # Small shapes consistent with the module: (N, C, H, W) logits, (N, H, W) labels.
    N, C, H, W = 2, 4, 16, 16

    key = jax.random.PRNGKey(0)
    k_logits, k_target = jax.random.split(key)
    logits = jax.random.normal(k_logits, (N, C, H, W), dtype=jnp.float32)
    target = jax.random.randint(k_target, (N, H, W), 0, C, dtype=jnp.int32)

    loss = dice_loss(logits, target)
    loss = jax.block_until_ready(loss)

    ref = dice_loss_ref(logits, target)
    assert jnp.allclose(loss, ref, rtol=1e-5, atol=1e-5), (loss, ref)

    print("KERNEL_OK")
</pallas_src>

<mosaic_0001>
module attributes {stable_mosaic.version = 11 : i64} {
  func.func @_dice_loss_kernel(%arg0: i32, %arg1: memref<1x4x256xf32, #tpu.memory_space<vmem>>, %arg2: memref<1x1x256xi32, #tpu.memory_space<vmem>>, %arg3: memref<1xf32, #tpu.memory_space<smem>>) attributes {dimension_semantics = [#tpu.dimension_semantics<arbitrary>], iteration_bounds = array<i64: 2>, scalar_prefetch = 0 : i64, scratch_operands = 0 : i64, tpu.core_type = #tpu.core_type<tc>, window_params = [{transform_indices = @transform_0, window_bounds = array<i64: 1, 4, 256>}, {transform_indices = @transform_1, window_bounds = array<i64: 1, 1, 256>}, {transform_indices = @transform_2, window_bounds = array<i64: 1>}]} {
    %c0 = arith.constant 0 : index
    %c0_0 = arith.constant 0 : index
    %c0_1 = arith.constant 0 : index
    %0 = vector.load %arg1[%c0, %c0_0, %c0_1] : memref<1x4x256xf32, #tpu.memory_space<vmem>>, vector<1x4x256xf32>
    %1 = vector.shape_cast %0 : vector<1x4x256xf32> to vector<4x256xf32>
    %c0_2 = arith.constant 0 : index
    %c0_3 = arith.constant 0 : index
    %c0_4 = arith.constant 0 : index
    %2 = vector.load %arg2[%c0_2, %c0_3, %c0_4] : memref<1x1x256xi32, #tpu.memory_space<vmem>>, vector<1x1x256xi32>
    %3 = vector.shape_cast %2 : vector<1x1x256xi32> to vector<1x256xi32>
    %cst = arith.constant dense<0xFF800000> : vector<256xf32>
    %4 = vector.multi_reduction <maximumf>, %1, %cst [0] : vector<4x256xf32> to vector<256xf32>
    %5 = vector.shape_cast %4 : vector<256xf32> to vector<1x256xf32>
    %6 = vector.broadcast %5 : vector<1x256xf32> to vector<4x256xf32>
    %7 = arith.subf %1, %6 : vector<4x256xf32>
    %8 = math.exp %7 : vector<4x256xf32>
    %cst_5 = arith.constant dense<0.000000e+00> : vector<256xf32>
    %9 = vector.multi_reduction <add>, %8, %cst_5 [0] : vector<4x256xf32> to vector<256xf32>
    %10 = vector.shape_cast %9 : vector<256xf32> to vector<1x256xf32>
    %11 = vector.broadcast %10 : vector<1x256xf32> to vector<4x256xf32>
    %12 = arith.divf %8, %11 : vector<4x256xf32>
    %13 = tpu.iota {dimensions = array<i32: 0>} : vector<4x256xi32>
    %14 = vector.broadcast %3 : vector<1x256xi32> to vector<4x256xi32>
    %15 = arith.cmpi eq, %13, %14 : vector<4x256xi32>
    %16 = arith.extui %15 : vector<4x256xi1> to vector<4x256xi32>
    %17 = arith.sitofp %16 : vector<4x256xi32> to vector<4x256xf32>
    %18 = arith.mulf %12, %17 : vector<4x256xf32>
    %19 = vector.shape_cast %18 : vector<4x256xf32> to vector<1x4x256xf32>
    %cst_6 = arith.constant dense<0.000000e+00> : vector<1xf32>
    %20 = vector.multi_reduction <add>, %19, %cst_6 [1, 2] : vector<1x4x256xf32> to vector<1xf32>
    %21 = vector.shape_cast %20 : vector<1xf32> to vector<1x1x1xf32>
    %22 = vector.extract %21[0, 0, 0] : f32 from vector<1x1x1xf32>
    %23 = vector.shape_cast %12 : vector<4x256xf32> to vector<1x4x256xf32>
    %cst_7 = arith.constant dense<0.000000e+00> : vector<1xf32>
    %24 = vector.multi_reduction <add>, %23, %cst_7 [1, 2] : vector<1x4x256xf32> to vector<1xf32>
    %25 = vector.shape_cast %24 : vector<1xf32> to vector<1x1x1xf32>
    %26 = vector.extract %25[0, 0, 0] : f32 from vector<1x1x1xf32>
    %cst_8 = arith.constant 9.99999974E-6 : f32
    %27 = arith.addf %22, %cst_8 : f32
    %cst_9 = arith.constant 2.000000e+00 : f32
    %28 = arith.mulf %cst_9, %27 : f32
    %cst_10 = arith.constant 2.560000e+02 : f32
    %29 = arith.addf %26, %cst_10 : f32
    %cst_11 = arith.constant 9.99999974E-6 : f32
    %30 = arith.addf %29, %cst_11 : f32
    %31 = arith.divf %28, %30 : f32
    %c0_i32 = arith.constant 0 : i32
    %32 = arith.cmpi eq, %arg0, %c0_i32 : i32
    %33 = arith.extui %32 : i1 to i32
    %c0_i32_12 = arith.constant 0 : i32
    %34 = arith.cmpi ne, %33, %c0_i32_12 : i32
    scf.if %34 {
      %cst_16 = arith.constant 0.000000e+00 : f32
      %c0_17 = arith.constant 0 : index
      %41 = memref.load %arg3[%c0_17] : memref<1xf32, #tpu.memory_space<smem>>
      memref.store %cst_16, %arg3[%c0_17] : memref<1xf32, #tpu.memory_space<smem>>
    } else {
    }
    %c0_13 = arith.constant 0 : index
    %35 = memref.load %arg3[%c0_13] : memref<1xf32, #tpu.memory_space<smem>>
    %36 = arith.addf %35, %31 : f32
    %c0_14 = arith.constant 0 : index
    %37 = memref.load %arg3[%c0_14] : memref<1xf32, #tpu.memory_space<smem>>
    memref.store %36, %arg3[%c0_14] : memref<1xf32, #tpu.memory_space<smem>>
    %c1_i32 = arith.constant 1 : i32
    %38 = arith.cmpi eq, %arg0, %c1_i32 : i32
    %39 = arith.extui %38 : i1 to i32
    %c0_i32_15 = arith.constant 0 : i32
    %40 = arith.cmpi ne, %39, %c0_i32_15 : i32
    scf.if %40 {
      %c0_16 = arith.constant 0 : index
      %41 = memref.load %arg3[%c0_16] : memref<1xf32, #tpu.memory_space<smem>>
      %cst_17 = arith.constant 2.000000e+00 : f32
      %42 = arith.divf %41, %cst_17 : f32
      %cst_18 = arith.constant 1.000000e+00 : f32
      %43 = arith.subf %cst_18, %42 : f32
      %c0_19 = arith.constant 0 : index
      %44 = memref.load %arg3[%c0_19] : memref<1xf32, #tpu.memory_space<smem>>
      memref.store %43, %arg3[%c0_19] : memref<1xf32, #tpu.memory_space<smem>>
    } else {
    }
    return
  }
  func.func @transform_0(%arg0: i32) -> (i32, i32, i32) {
    %c0_i32 = arith.constant 0 : i32
    %c0_i32_0 = arith.constant 0 : i32
    %c0_i32_1 = arith.constant 0 : i32
    return %arg0, %c0_i32, %c0_i32_0 : i32, i32, i32
  }
  func.func @transform_1(%arg0: i32) -> (i32, i32, i32) {
    %c0_i32 = arith.constant 0 : i32
    %c0_i32_0 = arith.constant 0 : i32
    %c0_i32_1 = arith.constant 0 : i32
    return %arg0, %c0_i32, %c0_i32_0 : i32, i32, i32
  }
  func.func @transform_2(%arg0: i32) -> i32 {
    %c0_i32 = arith.constant 0 : i32
    %c0_i32_0 = arith.constant 0 : i32
    return %c0_i32 : i32
  }
}

</mosaic_0001>

<llo_original>
// kernel: tpu_custom_call.1
$region0: #{tpu_custom_call.1}
  #allocation0 [shape = 'u32[]', space=smem, size = 0x4, offset = 0x4, fixed_abs, tag = 'smem constant byte address 0x4 - core index']
  #allocation1 [shape = 'u32[144,128]{1,0:T(1,128)}', space=vmem, size = 0x12000, scoped, tag = 'internal scratch']
  %s0 = inlined_call_operand.hbm [shape: f32[2,4,256], index: 0, kind: input, shape index: {}]
  %s1 = inlined_call_operand.hbm [shape: s32[2,1,256], index: 1, kind: input, shape index: {}]
  %s2 = inlined_call_operand.hbm [shape: f32[1], index: 2, kind: output, shape index: {}]
  %s3 = sld [smem:[#allocation0]]
  $region57: #{tpu_custom_call.1} parent=0
    _
  %s5 = ssub.s32 1, %s3
  %s6 = scalar_select 0, %s5, %s3
  $region1: #{tpu_custom_call.1} parent=0
    #allocation2 [shape = 'u8[8192]{0}', space=vmem, size = 0x2000, scoped, tag = 'input window, operand 0']
    #allocation3 [shape = 's32[2]{0}', space=sflag, size = 0x8, scoped, tag = 'scoped memory for tpu_custom_call.1']
    #allocation4 [shape = 's32[2]{0}', space=sflag, size = 0x8, scoped, tag = 'scoped memory for tpu_custom_call.1']
    #allocation5 [shape = 'u8[2048]{0}', space=vmem, size = 0x800, scoped, tag = 'input window, operand 1']
    #allocation6 [shape = 's32[2]{0}', space=sflag, size = 0x8, scoped, tag = 'scoped memory for tpu_custom_call.1']
    #allocation7 [shape = 'u8[512]{0}', space=smem, size = 0x200, scoped, tag = 'output window, operand 0, single buffered']
    %7 = vsyncpa [#allocation3], 0
    %s8 = scalar_lea.sflag [#allocation3], 1
    %9 = vsyncpa %s8, 0
    %10 = vsyncpa [#allocation6], 0
    %s11 = scalar_lea.sflag [#allocation6], 1
    %12 = vsyncpa %s11, 0
    %13 = vsyncpa [#allocation4], 0
    loop: start=0, step=1, limit=4
    $region2: #{tpu_custom_call.1} parent=1 // loop_pre_header
      _
    $region3: #{tpu_custom_call.1} parent=1 // loop_header
      %s15 = sphi 0, %s19
      %p16 = scmp.ge.s32.totalorder %s15, 4
      %s25 = sphi 0, %s27
      %s28 = sphi 0, %s25
      %s29 = sphi 0, %s28
      %s45 = sphi 0, %s29
      %s51 = sphi 0, %s53
      %s54 = sphi 0, %s51
      %s55 = sphi 0, %s54
      %s71 = sphi 0, %s55
      %s75 = sphi 0, %s75
      %s77 = sphi 0, %s75
      %s78 = sphi 0, %s77
      %s92 = sphi 0, %s78
    $region4: #{tpu_custom_call.1} parent=1 // loop_header_branch
      %18 = sbr.rel (%p16) target = $region8
    $region5: #{tpu_custom_call.1} parent=1 // loop_body
      %s20 = ssub.s32 %s15, 1
      %s21 = ssub.s32 %s15, 2
      %s22 = sadd.s32 %s15, 1
      %s23 = ssub.s32 %s15, %s22
      %p24 = scmp.eq.s32.totalorder %s23, 0
      %s26 = sadd.s32 %s25, 1
      %s27 = scalar_select %p24, %s25, %s26
      %p30 = pneg %p24
      %p31 = scmp.eq.s32.totalorder %s15, 1
      %p32 = por %p30, %p31
      %p33 = scmp.ne.s32.totalorder %s25, %s28
      %p34 = scmp.eq.s32.totalorder %s15, 0
      %p35 = por %p33, %p34
      %p36 = scmp.ne.s32.totalorder %s25, %s28
      %p37 = scmp.eq.s32.totalorder %s20, 1
      %p38 = por %p36, %p37
      %p39 = scmp.ne.s32.totalorder %s28, %s29
      %p40 = scmp.eq.s32.totalorder %s20, 0
      %p41 = por %p39, %p40
      %p42 = scmp.ne.s32.totalorder %s28, %s29
      %p43 = scmp.eq.s32.totalorder %s21, 1
      %p44 = por %p42, %p43
      %p46 = scmp.ne.s32.totalorder %s29, %s45
      %p47 = scmp.eq.s32.totalorder %s21, 0
      %p48 = por %p46, %p47
      %s49 = ssub.s32 %s15, %s22
      %p50 = scmp.eq.s32.totalorder %s49, 0
      %s52 = sadd.s32 %s51, 1
      %s53 = scalar_select %p50, %s51, %s52
      %p56 = pneg %p50
      %p57 = scmp.eq.s32.totalorder %s15, 1
      %p58 = por %p56, %p57
      %p59 = scmp.ne.s32.totalorder %s51, %s54
      %p60 = scmp.eq.s32.totalorder %s15, 0
      %p61 = por %p59, %p60
      %p62 = scmp.ne.s32.totalorder %s51, %s54
      %p63 = scmp.eq.s32.totalorder %s20, 1
      %p64 = por %p62, %p63
      %p65 = scmp.ne.s32.totalorder %s54, %s55
      %p66 = scmp.eq.s32.totalorder %s20, 0
      %p67 = por %p65, %p66
      %p68 = scmp.ne.s32.totalorder %s54, %s55
      %p69 = scmp.eq.s32.totalorder %s21, 1
      %p70 = por %p68, %p69
      %p72 = scmp.ne.s32.totalorder %s55, %s71
      %p73 = scmp.eq.s32.totalorder %s21, 0
      %p74 = por %p72, %p73
      %s76 = sadd.s32 %s75, 1
      %p79 = scmp.eq.s32.totalorder %s15, 1
      %p80 = scmp.ne.s32.totalorder %s75, %s77
      %p81 = scmp.eq.s32.totalorder %s15, 0
      %p82 = por %p80, %p81
      %p83 = scmp.ne.s32.totalorder %s75, %s77
      %p84 = scmp.eq.s32.totalorder %s20, 1
      %p85 = por %p83, %p84
      %p86 = scmp.ne.s32.totalorder %s77, %s78
      %p87 = scmp.eq.s32.totalorder %s20, 0
      %p88 = por %p86, %p87
      %p89 = scmp.ne.s32.totalorder %s77, %s78
      %p90 = scmp.eq.s32.totalorder %s21, 1
      %p91 = por %p89, %p90
      %p93 = scmp.ne.s32.totalorder %s78, %s92
      %p94 = scmp.eq.s32.totalorder %s21, 0
      %p95 = por %p93, %p94
      %p96 = scmp.le.s32.totalorder 1, %s15
      %p97 = scmp.lt.s32.totalorder %s15, 3
      %p98 = pnand %p96, %p97
      %p99 = pneg %p98
      // Predicated region
      $region9: #{tpu_custom_call.1} parent=5 // pred_check
        _
      $region10: #{tpu_custom_call.1} parent=5 // pred_check_branch
        %101 = sbr.rel (%p98) target = $region12
      $region11: #{tpu_custom_call.1} parent=5 // pred_region
        %s102 = ssub.s32 %s15, 1
      $region12: #{tpu_custom_call.1} parent=5 // pred_fallthru
        _
      %p103 = scmp.lt.s32.totalorder %s15, 2
      // Predicated region
      $region13: #{tpu_custom_call.1} parent=5 // pred_check
        %p104 = pneg %p103
      $region14: #{tpu_custom_call.1} parent=5 // pred_check_branch
        %106 = sbr.rel (%p104) target = $region16
      $region15: #{tpu_custom_call.1} parent=5 // pred_region
        // Predicated region
        $region17: #{tpu_custom_call.1} parent=15 // pred_check
          %p107 = pneg %p35
        $region18: #{tpu_custom_call.1} parent=15 // pred_check_branch
          %109 = sbr.rel (%p107) target = $region20
        $region19: #{tpu_custom_call.1} parent=15 // pred_region
          %s110 = sand.u32 %s25, 1
          %s111 = scalar_lea.sflag [#allocation3], %s110
          %s112 = sand.u32 %s25, 1
          %s113 = smul.addr %s112, 8
          %s114 = scalar_lea.vmem [#allocation2], %s113
          %s116 = ssub.s32 128, 128
          %117 = vsyncadd %s111, %s116
          %s118 = smul.addr %s15, 2
          %s119 = smul.addr %s118, 64
          %s120 = scalar_lea.hbm %s0, %s119
          %s122 = sshll.u32 %s114, 4
          %s123 = int_to_ptr.vmem [resolvable:$true] %s122
          %125 = dma.hbm_to_vmem [thread:$0]  %s120, 128, %s123, %s111
        $region20: #{tpu_custom_call.1} parent=15 // pred_fallthru
          _
        // Predicated region
        $region21: #{tpu_custom_call.1} parent=15 // pred_check
          %p126 = pneg %p61
        $region22: #{tpu_custom_call.1} parent=15 // pred_check_branch
          %128 = sbr.rel (%p126) target = $region24
        $region23: #{tpu_custom_call.1} parent=15 // pred_region
          %s129 = sand.u32 %s51, 1
          %s130 = scalar_lea.sflag [#allocation6], %s129
          %s131 = sand.u32 %s51, 1
          %s132 = smul.addr %s131, 2
          %s133 = scalar_lea.vmem [#allocation5], %s132
          %s135 = ssub.s32 32, 32
          %136 = vsyncadd %s130, %s135
          %s137 = smul.addr %s15, 2
          %s138 = smul.addr %s137, 16
          %s139 = scalar_lea.hbm %s1, %s138
          %s141 = sshll.u32 %s133, 4
          %s142 = int_to_ptr.vmem [resolvable:$true] %s141
          %144 = dma.hbm_to_vmem [thread:$0]  %s139, 32, %s142, %s130
        $region24: #{tpu_custom_call.1} parent=15 // pred_fallthru
          _
      $region16: #{tpu_custom_call.1} parent=5 // pred_fallthru
        _
      %p145 = scmp.le.s32.totalorder 1, %s15
      %p146 = scmp.lt.s32.totalorder %s15, 3
      %p147 = pnand %p145, %p146
      %p148 = pneg %p147
      // Predicated region
      $region25: #{tpu_custom_call.1} parent=5 // pred_check
        _
      $region26: #{tpu_custom_call.1} parent=5 // pred_check_branch
        %150 = sbr.rel (%p147) target = $region28
      $region27: #{tpu_custom_call.1} parent=5 // pred_region
        %s151 = ssub.s32 %s15, 1
        %s152 = sand.u32 %s28, 1
        %s153 = scalar_lea.sflag [#allocation3], %s152
        %s154 = sand.u32 %s28, 1
        %s155 = smul.addr %s154, 8
        %s156 = scalar_lea.vmem [#allocation2], %s155
        // Predicated region
        $region29: #{tpu_custom_call.1} parent=27 // pred_check
          %p157 = pneg %p41
        $region30: #{tpu_custom_call.1} parent=27 // pred_check_branch
          %159 = sbr.rel (%p157) target = $region32
        $region31: #{tpu_custom_call.1} parent=27 // pred_region
          %160 = dma.done %s153, 128
        $region32: #{tpu_custom_call.1} parent=27 // pred_fallthru
          _
        %s161 = sand.u32 %s54, 1
        %s162 = scalar_lea.sflag [#allocation6], %s161
        %s163 = sand.u32 %s54, 1
        %s164 = smul.addr %s163, 2
        %s165 = scalar_lea.vmem [#allocation5], %s164
        // Predicated region
        $region33: #{tpu_custom_call.1} parent=27 // pred_check
          %p166 = pneg %p67
        $region34: #{tpu_custom_call.1} parent=27 // pred_check_branch
          %168 = sbr.rel (%p166) target = $region36
        $region35: #{tpu_custom_call.1} parent=27 // pred_region
          %169 = dma.done %s162, 32
        $region36: #{tpu_custom_call.1} parent=27 // pred_fallthru
          _
        %s170 = sand.u32 %s28, 1
        %s171 = scalar_lea.sflag [#allocation3], %s170
        %s172 = sand.u32 %s28, 1
        %s173 = smul.addr %s172, 8
        %s174 = scalar_lea.vmem [#allocation2], %s173
        %p175 = pneg %p41
        %p176 = pneg %p38
        %s177 = sand.u32 %s54, 1
        %s178 = scalar_lea.sflag [#allocation6], %s177
        %s179 = sand.u32 %s54, 1
        %s180 = smul.addr %s179, 2
        %s181 = scalar_lea.vmem [#allocation5], %s180
        %p182 = pneg %p67
        %p183 = pneg %p64
        %p184 = pneg %p88
        %p185 = pneg %p85
        %v186 = vld [vmem:[%s156] sm:$0xff]
        %v187 = vld [vmem:[%s165] sm:$0x3]
        %v189 = vcombine.high %v186, %v186
        %vm191 = vcmask 1043456
        %v192 = vsel %vm191, %v186, -inf
        %v193 = vrot.slane %v192, 4
        %v194 = vmax.f32 %v192, %v193
        %v195 = vrot.slane %v194, 2
        %v196 = vmax.f32 %v194, %v195
        %v197 = vrot.slane %v196, 1
        %v198 = vmax.f32 %v196, %v197
        %v199 = vsel %vm191, %v189, -inf
        %v200 = vrot.slane %v199, 4
        %v201 = vmax.f32 %v199, %v200
        %v202 = vrot.slane %v201, 2
        %v203 = vmax.f32 %v201, %v202
        %v204 = vrot.slane %v203, 1
        %v205 = vmax.f32 %v203, %v204
        %v208 = vcombine.low %v198, %v205
        %v210 = vsub.f32 %v186, %v208
        %v211 = vmul.f32 %v210, 1.442695
        %v212 = vpow.pop %v211
        %v214 = vcombine.high %v212, %v212
        %v216 = vsel %vm191, %v212, 0.0
        %v217 = vrot.slane %v216, 4
        %v218 = vadd.f32 %v216, %v217
        %v219 = vrot.slane %v218, 2
        %v220 = vadd.f32 %v218, %v219
        %v221 = vrot.slane %v220, 1
        %v222 = vadd.f32 %v220, %v221
        %v223 = vsel %vm191, %v214, 0.0
        %v224 = vrot.slane %v223, 4
        %v225 = vadd.f32 %v223, %v224
        %v226 = vrot.slane %v225, 2
        %v227 = vadd.f32 %v225, %v226
        %v228 = vrot.slane %v227, 1
        %v229 = vadd.f32 %v227, %v228
        %v232 = vcombine.low %v222, %v229
        %v234 = vrcp.pop %v232
        %v235 = vmul.f32 %v212, %v234
        %v236 = vlaneseq
        %v237 = vshrl.u32 %v236, 7
        %v238 = vlaneseq
        %v239 = vshrl.u32 %v238, 7
        %v240 = vsub.s32 0, %v239
        %v241 = vrot.slane %v187, %v240
        %v242 = vlaneseq
        %v243 = vshrl.u32 %v242, 7
        %v244 = vsub.s32 1, %v243
        %v245 = vrot.slane %v187, %v244
        %vm246 = vcmp.eq.s32.totalorder %v237, %v241
        %vm247 = vcmp.eq.s32.totalorder %v237, %v245
        %v248 = vsel %vm246, 1, 0
        %v249 = vsel %vm247, 1, 0
        %v250 = vcvt.s32.f32 %v248
        %v251 = vcvt.s32.f32 %v249
        %v254 = vcombine.low %v250, %v251
        %v256 = vmul.f32 %v235, %v254
        %v258 = vcombine.high %v256, %v256
        %v260 = vsel %vm191, %v256, 0.0
        %v261 = vsel %vm191, %v258, 0.0
        %v262 = vadd.f32 %v260, %v261
        %263 = vadd.xlane.f32.xlu0 %v262
        %v264 = vpop.xlane.xlu0 %263
        %v265 = vrot.slane %v264, 4
        %v266 = vadd.f32 %v264, %v265
        %v267 = vrot.slane %v266, 2
        %v268 = vadd.f32 %v266, %v267
        %v269 = vrot.slane %v268, 1
        %v270 = vadd.f32 %v268, %v269
        %s271 = vtos %v270
        %v273 = vcombine.high %v235, %v235
        %v275 = vsel %vm191, %v235, 0.0
        %v276 = vsel %vm191, %v273, 0.0
        %v277 = vadd.f32 %v275, %v276
        %278 = vadd.xlane.f32.xlu0 %v277
        %v279 = vpop.xlane.xlu0 %278
        %v280 = vrot.slane %v279, 4
        %v281 = vadd.f32 %v279, %v280
        %v282 = vrot.slane %v281, 2
        %v283 = vadd.f32 %v281, %v282
        %v284 = vrot.slane %v283, 1
        %v285 = vadd.f32 %v283, %v284
        %s286 = vtos %v285
        %s287 = sadd.f32 %s271, 1e-05
        %s288 = smul.f32 %s287, 2.0
        %s289 = sadd.f32 %s286, 256.0
        %s290 = sadd.f32 %s289, 1e-05
        %v291 = vstv %s290
        %v292 = vrcp.pop %v291
        %s293 = vtos %v292
        %s294 = smul.f32 %s288, %s293
        %p295 = scmp.eq.s32.totalorder %s20, 0
        // Predicated region
        $region37: #{tpu_custom_call.1} parent=27 // pred_check
          %p296 = pneg %p295
        $region38: #{tpu_custom_call.1} parent=27 // pred_check_branch
          %298 = sbr.rel (%p296) target = $region40
        $region39: #{tpu_custom_call.1} parent=27 // pred_region
          %s299 = scalar_lea.smem [#allocation7], 0
          %300 = sst [smem:[%s299]] 0.0
        $region40: #{tpu_custom_call.1} parent=27 // pred_fallthru
          _
        %s301 = sld [smem:[#allocation7]]
        %s302 = sadd.f32 %s301, %s294
        %s303 = scalar_lea.smem [#allocation7], 0
        %304 = sst [smem:[%s303]] %s302
        %p305 = scmp.eq.s32.totalorder %s20, 1
        // Predicated region
        $region41: #{tpu_custom_call.1} parent=27 // pred_check
          %p306 = pneg %p305
        $region42: #{tpu_custom_call.1} parent=27 // pred_check_branch
          %308 = sbr.rel (%p306) target = $region44
        $region43: #{tpu_custom_call.1} parent=27 // pred_region
          %s309 = sld [smem:[#allocation7]]
          %v310 = vrcp.pop 2.0
          %s311 = vtos %v310
          %s312 = smul.f32 %s309, %s311
          %s313 = ssub.f32 1.0, %s312
          %314 = sst [smem:[%s303]] %s313
        $region44: #{tpu_custom_call.1} parent=27 // pred_fallthru
          _
        // Predicated region
        $region45: #{tpu_custom_call.1} parent=27 // pred_check
          %p315 = pneg %p85
        $region46: #{tpu_custom_call.1} parent=27 // pred_check_branch
          %317 = sbr.rel (%p315) target = $region48
        $region47: #{tpu_custom_call.1} parent=27 // pred_region
          %s319 = ssub.s32 16, 16
          %320 = vsyncadd [#allocation4], %s319
          %323 = dma.smem_to_hbm [#allocation7], 16, %s2, [#allocation4]
        $region48: #{tpu_custom_call.1} parent=27 // pred_fallthru
          _
        // Predicated region
        $region49: #{tpu_custom_call.1} parent=27 // pred_check
          %p324 = pneg %p85
        $region50: #{tpu_custom_call.1} parent=27 // pred_check_branch
          %326 = sbr.rel (%p324) target = $region52
        $region51: #{tpu_custom_call.1} parent=27 // pred_region
          %327 = dma.done [#allocation4], 16
        $region52: #{tpu_custom_call.1} parent=27 // pred_fallthru
          _
        %328 = sfence
      $region28: #{tpu_custom_call.1} parent=5 // pred_fallthru
        _
      %p329 = scmp.le.s32.totalorder 2, %s15
      // Predicated region
      $region53: #{tpu_custom_call.1} parent=5 // pred_check
        %p330 = pneg %p329
      $region54: #{tpu_custom_call.1} parent=5 // pred_check_branch
        %332 = sbr.rel (%p330) target = $region56
      $region55: #{tpu_custom_call.1} parent=5 // pred_region
        %s333 = ssub.s32 %s15, 2
      $region56: #{tpu_custom_call.1} parent=5 // pred_fallthru
        _
    $region6: #{tpu_custom_call.1} parent=1 // loop_footer
      %s19 = sadd.s32 1, %s15
    $region7: #{tpu_custom_call.1} parent=1 // loop_footer_branch
      %14 = sbr.rel target = $region3
    $region8: #{tpu_custom_call.1} parent=1 // loop_exit
      _
    %334 = vsyncpa [#allocation3], 1
    %s335 = scalar_lea.sflag [#allocation3], 1
    %336 = vsyncpa %s335, 1
    %337 = vsyncpa [#allocation6], 1
    %s338 = scalar_lea.sflag [#allocation6], 1
    %339 = vsyncpa %s338, 1
    %340 = vsyncpa [#allocation4], 1
    %s341 = scalar_lea.sflag [#allocation4], 1
    %342 = vsyncpa %s341, 1

</llo_original>
